<compile_context>
chip_gen: v5e
topology: v5e:2x2
jax: 0.10.0
libtpu: 0.0.40
codegen_flags: <defaults>
</compile_context>

<pallas_src>
import jax
import jax.numpy as jnp
from jax import lax
from jax.experimental import pallas as pl
from jax.experimental.pallas import tpu as pltpu


def _round_up(x, m):
    return -(-x // m) * m


# ---------------------------------------------------------------------------
# Path A: embedding table resident in VMEM, in-VMEM dynamic-row gather.
# ---------------------------------------------------------------------------
def embedding_vmem_gather_kernel(ids_ref, w_ref, emb_ref):
    # ids_ref : (N,)        int32, SMEM (scalar-prefetched token ids)
    # w_ref   : (V, E)      f32,   VMEM (constant index_map -> resident)
    # emb_ref : (TB, E)     f32,   VMEM output block
    blk = pl.program_id(0)
    tok_block = emb_ref.shape[0]
    vocab = w_ref.shape[0]
    n_tokens = ids_ref.shape[0]
    base = blk * tok_block

    def body(t, carry):
        # Tail tokens of the last (partial) block just re-read the last valid
        # id; their output rows are dropped by Pallas's boundary masking.
        tok = jnp.minimum(base + t, n_tokens - 1)
        row = ids_ref[tok]
        row = jnp.where((row >= 0) & (row < vocab), row, 0)  # OOB id -> pad row
        emb_ref[pl.ds(t, 1), :] = w_ref[pl.ds(row, 1), :]
        return carry

    lax.fori_loop(0, tok_block, body, 0, unroll=8)


# ---------------------------------------------------------------------------
# Path B: embedding table left in HBM, per-row DMAs straight into the output
# block (no VMEM staging copy).
# ---------------------------------------------------------------------------
def embedding_hbm_gather_kernel(ids_ref, w_hbm, emb_ref, sems):
    # ids_ref : (N,)      int32, SMEM
    # w_hbm   : (V, E)    f32, HBM (memory_space=pl.ANY)
    # emb_ref : (TB, E)   f32, VMEM output block (DMA destination)
    # sems    : (TB,)     DMA semaphores
    blk = pl.program_id(0)
    tok_block = emb_ref.shape[0]
    vocab = w_hbm.shape[0]
    n_tokens = ids_ref.shape[0]
    base = blk * tok_block

    copies = []
    for t in range(tok_block):
        tok = jnp.minimum(base + t, n_tokens - 1)
        row = ids_ref[tok]
        row = jnp.where((row >= 0) & (row < vocab), row, 0)
        cp = pltpu.make_async_copy(
            w_hbm.at[pl.ds(row, 1)],     # (1, E) row in HBM
            emb_ref.at[pl.ds(t, 1)],     # (1, E) row of the output block
            sems.at[t],
        )
        cp.start()
        copies.append(cp)
    # Wait with the exact descriptors used at start().
    for cp in copies:
        cp.wait()


def embedding_forward(ids, W, *, tok_block=256,
                      table_vmem_budget_bytes=16 * 1024 * 1024,
                      force_hbm_gather=False):
    """ids: int array of any shape; W: (V, E) float32.

    Returns (embeddings: ids.shape + (E,), mask: ids.shape float32).
    """
    orig_shape = ids.shape
    V, E = W.shape
    N = 1
    for d in orig_shape:
        N *= int(d)

    ids_flat = ids.reshape(N).astype(jnp.int32)
    # mask = (x != 0).float() -- trivial fused VPU op; kept in the wrapper so
    # the kernel only has a lane-dense output.
    mask = (ids != 0).astype(jnp.float32)

    table_bytes = V * E * W.dtype.itemsize
    use_vmem_table = (not force_hbm_gather) and (table_bytes <= table_vmem_budget_bytes)

    # --- token-block sizing ---------------------------------------------
    # multiple of 8 (sublane constraint), and keep >= 2 grid blocks when the
    # token count allows it (v7x megacore; no-op on v5e/v6e).
    tb = min(int(tok_block), _round_up(pl.cdiv(N, 2), 8))
    tb = max(8, _round_up(tb, 8))
    if not use_vmem_table:
        tb = min(tb, 64)   # bound the unrolled DMA issue/wait loops

    resident_table_bytes = 2 * table_bytes if use_vmem_table else 0
    # Shrink tb if (resident table + double-buffered output block, with margin)
    # would exceed a conservative cross-generation VMEM cap (v7x: 64 MiB phys).
    while tb > 8 and resident_table_bytes + 4 * tb * E * 4 > 40 * 1024 * 1024:
        tb = max(8, _round_up(tb // 2, 8))

    num_blocks = pl.cdiv(N, tb)
    out_block_bytes = tb * E * 4
    vmem_needed = resident_table_bytes + 4 * out_block_bytes
    vmem_limit = int(min(48 * 1024 * 1024, max(16 * 1024 * 1024, 2 * vmem_needed)))

    # --- specs ------------------------------------------------------------
    # index_maps receive (grid_idx, *scalar_prefetch_refs).
    out_spec = pl.BlockSpec((tb, E), lambda i, ids_ref: (i, 0))
    if use_vmem_table:
        kernel = embedding_vmem_gather_kernel
        w_spec = pl.BlockSpec((V, E), lambda i, ids_ref: (0, 0))  # resident
        scratch = []
        bytes_accessed = N * E * 4 + table_bytes + N * 4
    else:
        kernel = embedding_hbm_gather_kernel
        w_spec = pl.BlockSpec(memory_space=pl.ANY)                # stays in HBM
        scratch = [pltpu.SemaphoreType.DMA((tb,))]
        bytes_accessed = 2 * N * E * 4 + N * 4

    grid_spec = pltpu.PrefetchScalarGridSpec(
        num_scalar_prefetch=1,          # ids -> SMEM
        grid=(num_blocks,),
        in_specs=[w_spec],
        out_specs=out_spec,
        scratch_shapes=scratch,
    )

    emb_flat = pl.pallas_call(
        kernel,
        grid_spec=grid_spec,
        out_shape=jax.ShapeDtypeStruct((N, E), jnp.float32),
        compiler_params=pltpu.CompilerParams(
            dimension_semantics=("parallel",),
            vmem_limit_bytes=vmem_limit,
        ),
        cost_estimate=pl.CostEstimate(
            flops=0, transcendentals=0, bytes_accessed=bytes_accessed),
    )(ids_flat, W)

    emb = emb_flat.reshape(orig_shape + (E,))
    return emb, mask


def init_embedding_weight(key, vocab_size, embedding_size):
    # Mirrors Embedding.embedding_init: uniform(-0.05, 0.05), row 0 zeroed.
    W = jax.random.uniform(key, (vocab_size, embedding_size),
                           minval=-0.05, maxval=0.05, dtype=jnp.float32)
    W = W.at[0, :].set(0.0)
    return W


if __name__ == "__main__":
    V, E = 64, 128       # vocab_size x embedding_size

    key = jax.random.PRNGKey(0)
    k_w, k_ids1, k_ids2 = jax.random.split(key, 3)
    W = init_embedding_weight(k_w, V, E)

    # Test 1: (2, 8) tokens -> VMEM-resident gather path, 2 token blocks.
    ids1 = jax.random.randint(k_ids1, (2, 8), minval=0, maxval=V, dtype=jnp.int32)
    ids1 = ids1.at[0, 0].set(0).at[1, 3].set(0)     # exercise the padding mask
    emb1, mask1 = embedding_forward(ids1, W)

    # Test 2: (3, 7) -> N=21 tokens, not a multiple of the token block
    # (exercises the masked tail block).
    ids2 = jax.random.randint(k_ids2, (3, 7), minval=0, maxval=V, dtype=jnp.int32)
    ids2 = ids2.at[2, 6].set(0)
    emb2, mask2 = embedding_forward(ids2, W)

    # Test 3: force the HBM per-row-DMA gather path on the test-1 inputs.
    emb3, mask3 = embedding_forward(ids1, W, force_hbm_gather=True)

    jax.block_until_ready((emb1, mask1, emb2, mask2, emb3, mask3))

    for ids, emb, mask in ((ids1, emb1, mask1),
                           (ids2, emb2, mask2),
                           (ids1, emb3, mask3)):
        emb_ref = jnp.take(W, ids, axis=0)
        mask_ref = (ids != 0).astype(jnp.float32)
        assert emb.shape == ids.shape + (E,)
        assert mask.shape == ids.shape
        assert jnp.allclose(emb, emb_ref, atol=1e-6)
        assert jnp.allclose(mask, mask_ref)

    print("KERNEL_OK")
</pallas_src>

<mosaic_0001>
module attributes {stable_mosaic.version = 11 : i64} {
  func.func @embedding_vmem_gather_kernel(%arg0: i32, %arg1: memref<16xi32, #tpu.memory_space<smem>>, %arg2: memref<64x128xf32, #tpu.memory_space<vmem>>, %arg3: memref<8x128xf32, #tpu.memory_space<vmem>>) attributes {dimension_semantics = [#tpu.dimension_semantics<parallel>], iteration_bounds = array<i64: 2>, scalar_prefetch = 1 : i64, scratch_operands = 0 : i64, tpu.core_type = #tpu.core_type<tc>, window_params = [{pipeline_mode = #tpu.pipeline_mode<synchronous>, transform_indices = @transform_0, window_bounds = array<i64: 64, 128>}, {transform_indices = @transform_1, window_bounds = array<i64: 8, 128>}]} {
    %c8_i32 = arith.constant 8 : i32
    %0 = arith.muli %arg0, %c8_i32 : i32
    %c0_i32 = arith.constant 0 : i32
    %1 = arith.addi %0, %c0_i32 : i32
    %c15_i32 = arith.constant 15 : i32
    %2 = arith.minsi %1, %c15_i32 : i32
    %3 = arith.index_cast %2 : i32 to index
    %4 = memref.load %arg1[%3] : memref<16xi32, #tpu.memory_space<smem>>
    %c0_i32_0 = arith.constant 0 : i32
    %5 = arith.cmpi sge, %4, %c0_i32_0 : i32
    %c64_i32 = arith.constant 64 : i32
    %6 = arith.cmpi slt, %4, %c64_i32 : i32
    %7 = arith.andi %5, %6 : i1
    %c0_i32_1 = arith.constant 0 : i32
    %8 = arith.select %7, %4, %c0_i32_1 : i32
    %9 = arith.index_cast %8 : i32 to index
    %c0 = arith.constant 0 : index
    %10 = vector.load %arg2[%9, %c0] : memref<64x128xf32, #tpu.memory_space<vmem>>, vector<1x128xf32>
    %11 = arith.index_cast %c0_i32 : i32 to index
    %c0_2 = arith.constant 0 : index
    %12 = vector.load %arg3[%11, %c0_2] : memref<8x128xf32, #tpu.memory_space<vmem>>, vector<1x128xf32>
    tpu.vector_store %arg3[%11, %c0_2], %10 {strides = array<i32>} : memref<8x128xf32, #tpu.memory_space<vmem>>, vector<1x128xf32>,
    %c1_i32 = arith.constant 1 : i32
    %13 = arith.addi %0, %c1_i32 : i32
    %c15_i32_3 = arith.constant 15 : i32
    %14 = arith.minsi %13, %c15_i32_3 : i32
    %15 = arith.index_cast %14 : i32 to index
    %16 = memref.load %arg1[%15] : memref<16xi32, #tpu.memory_space<smem>>
    %c0_i32_4 = arith.constant 0 : i32
    %17 = arith.cmpi sge, %16, %c0_i32_4 : i32
    %c64_i32_5 = arith.constant 64 : i32
    %18 = arith.cmpi slt, %16, %c64_i32_5 : i32
    %19 = arith.andi %17, %18 : i1
    %c0_i32_6 = arith.constant 0 : i32
    %20 = arith.select %19, %16, %c0_i32_6 : i32
    %21 = arith.index_cast %20 : i32 to index
    %c0_7 = arith.constant 0 : index
    %22 = vector.load %arg2[%21, %c0_7] : memref<64x128xf32, #tpu.memory_space<vmem>>, vector<1x128xf32>
    %23 = arith.index_cast %c1_i32 : i32 to index
    %c0_8 = arith.constant 0 : index
    %24 = vector.load %arg3[%23, %c0_8] : memref<8x128xf32, #tpu.memory_space<vmem>>, vector<1x128xf32>
    tpu.vector_store %arg3[%23, %c0_8], %22 {strides = array<i32>} : memref<8x128xf32, #tpu.memory_space<vmem>>, vector<1x128xf32>,
    %c2_i32 = arith.constant 2 : i32
    %25 = arith.addi %0, %c2_i32 : i32
    %c15_i32_9 = arith.constant 15 : i32
    %26 = arith.minsi %25, %c15_i32_9 : i32
    %27 = arith.index_cast %26 : i32 to index
    %28 = memref.load %arg1[%27] : memref<16xi32, #tpu.memory_space<smem>>
    %c0_i32_10 = arith.constant 0 : i32
    %29 = arith.cmpi sge, %28, %c0_i32_10 : i32
    %c64_i32_11 = arith.constant 64 : i32
    %30 = arith.cmpi slt, %28, %c64_i32_11 : i32
    %31 = arith.andi %29, %30 : i1
    %c0_i32_12 = arith.constant 0 : i32
    %32 = arith.select %31, %28, %c0_i32_12 : i32
    %33 = arith.index_cast %32 : i32 to index
    %c0_13 = arith.constant 0 : index
    %34 = vector.load %arg2[%33, %c0_13] : memref<64x128xf32, #tpu.memory_space<vmem>>, vector<1x128xf32>
    %35 = arith.index_cast %c2_i32 : i32 to index
    %c0_14 = arith.constant 0 : index
    %36 = vector.load %arg3[%35, %c0_14] : memref<8x128xf32, #tpu.memory_space<vmem>>, vector<1x128xf32>
    tpu.vector_store %arg3[%35, %c0_14], %34 {strides = array<i32>} : memref<8x128xf32, #tpu.memory_space<vmem>>, vector<1x128xf32>,
    %c3_i32 = arith.constant 3 : i32
    %37 = arith.addi %0, %c3_i32 : i32
    %c15_i32_15 = arith.constant 15 : i32
    %38 = arith.minsi %37, %c15_i32_15 : i32
    %39 = arith.index_cast %38 : i32 to index
    %40 = memref.load %arg1[%39] : memref<16xi32, #tpu.memory_space<smem>>
    %c0_i32_16 = arith.constant 0 : i32
    %41 = arith.cmpi sge, %40, %c0_i32_16 : i32
    %c64_i32_17 = arith.constant 64 : i32
    %42 = arith.cmpi slt, %40, %c64_i32_17 : i32
    %43 = arith.andi %41, %42 : i1
    %c0_i32_18 = arith.constant 0 : i32
    %44 = arith.select %43, %40, %c0_i32_18 : i32
    %45 = arith.index_cast %44 : i32 to index
    %c0_19 = arith.constant 0 : index
    %46 = vector.load %arg2[%45, %c0_19] : memref<64x128xf32, #tpu.memory_space<vmem>>, vector<1x128xf32>
    %47 = arith.index_cast %c3_i32 : i32 to index
    %c0_20 = arith.constant 0 : index
    %48 = vector.load %arg3[%47, %c0_20] : memref<8x128xf32, #tpu.memory_space<vmem>>, vector<1x128xf32>
    tpu.vector_store %arg3[%47, %c0_20], %46 {strides = array<i32>} : memref<8x128xf32, #tpu.memory_space<vmem>>, vector<1x128xf32>,
    %c4_i32 = arith.constant 4 : i32
    %49 = arith.addi %0, %c4_i32 : i32
    %c15_i32_21 = arith.constant 15 : i32
    %50 = arith.minsi %49, %c15_i32_21 : i32
    %51 = arith.index_cast %50 : i32 to index
    %52 = memref.load %arg1[%51] : memref<16xi32, #tpu.memory_space<smem>>
    %c0_i32_22 = arith.constant 0 : i32
    %53 = arith.cmpi sge, %52, %c0_i32_22 : i32
    %c64_i32_23 = arith.constant 64 : i32
    %54 = arith.cmpi slt, %52, %c64_i32_23 : i32
    %55 = arith.andi %53, %54 : i1
    %c0_i32_24 = arith.constant 0 : i32
    %56 = arith.select %55, %52, %c0_i32_24 : i32
    %57 = arith.index_cast %56 : i32 to index
    %c0_25 = arith.constant 0 : index
    %58 = vector.load %arg2[%57, %c0_25] : memref<64x128xf32, #tpu.memory_space<vmem>>, vector<1x128xf32>
    %59 = arith.index_cast %c4_i32 : i32 to index
    %c0_26 = arith.constant 0 : index
    %60 = vector.load %arg3[%59, %c0_26] : memref<8x128xf32, #tpu.memory_space<vmem>>, vector<1x128xf32>
    tpu.vector_store %arg3[%59, %c0_26], %58 {strides = array<i32>} : memref<8x128xf32, #tpu.memory_space<vmem>>, vector<1x128xf32>,
    %c5_i32 = arith.constant 5 : i32
    %61 = arith.addi %0, %c5_i32 : i32
    %c15_i32_27 = arith.constant 15 : i32
    %62 = arith.minsi %61, %c15_i32_27 : i32
    %63 = arith.index_cast %62 : i32 to index
    %64 = memref.load %arg1[%63] : memref<16xi32, #tpu.memory_space<smem>>
    %c0_i32_28 = arith.constant 0 : i32
    %65 = arith.cmpi sge, %64, %c0_i32_28 : i32
    %c64_i32_29 = arith.constant 64 : i32
    %66 = arith.cmpi slt, %64, %c64_i32_29 : i32
    %67 = arith.andi %65, %66 : i1
    %c0_i32_30 = arith.constant 0 : i32
    %68 = arith.select %67, %64, %c0_i32_30 : i32
    %69 = arith.index_cast %68 : i32 to index
    %c0_31 = arith.constant 0 : index
    %70 = vector.load %arg2[%69, %c0_31] : memref<64x128xf32, #tpu.memory_space<vmem>>, vector<1x128xf32>
    %71 = arith.index_cast %c5_i32 : i32 to index
    %c0_32 = arith.constant 0 : index
    %72 = vector.load %arg3[%71, %c0_32] : memref<8x128xf32, #tpu.memory_space<vmem>>, vector<1x128xf32>
    tpu.vector_store %arg3[%71, %c0_32], %70 {strides = array<i32>} : memref<8x128xf32, #tpu.memory_space<vmem>>, vector<1x128xf32>,
    %c6_i32 = arith.constant 6 : i32
    %73 = arith.addi %0, %c6_i32 : i32
    %c15_i32_33 = arith.constant 15 : i32
    %74 = arith.minsi %73, %c15_i32_33 : i32
    %75 = arith.index_cast %74 : i32 to index
    %76 = memref.load %arg1[%75] : memref<16xi32, #tpu.memory_space<smem>>
    %c0_i32_34 = arith.constant 0 : i32
    %77 = arith.cmpi sge, %76, %c0_i32_34 : i32
    %c64_i32_35 = arith.constant 64 : i32
    %78 = arith.cmpi slt, %76, %c64_i32_35 : i32
    %79 = arith.andi %77, %78 : i1
    %c0_i32_36 = arith.constant 0 : i32
    %80 = arith.select %79, %76, %c0_i32_36 : i32
    %81 = arith.index_cast %80 : i32 to index
    %c0_37 = arith.constant 0 : index
    %82 = vector.load %arg2[%81, %c0_37] : memref<64x128xf32, #tpu.memory_space<vmem>>, vector<1x128xf32>
    %83 = arith.index_cast %c6_i32 : i32 to index
    %c0_38 = arith.constant 0 : index
    %84 = vector.load %arg3[%83, %c0_38] : memref<8x128xf32, #tpu.memory_space<vmem>>, vector<1x128xf32>
    tpu.vector_store %arg3[%83, %c0_38], %82 {strides = array<i32>} : memref<8x128xf32, #tpu.memory_space<vmem>>, vector<1x128xf32>,
    %c7_i32 = arith.constant 7 : i32
    %85 = arith.addi %0, %c7_i32 : i32
    %c15_i32_39 = arith.constant 15 : i32
    %86 = arith.minsi %85, %c15_i32_39 : i32
    %87 = arith.index_cast %86 : i32 to index
    %88 = memref.load %arg1[%87] : memref<16xi32, #tpu.memory_space<smem>>
    %c0_i32_40 = arith.constant 0 : i32
    %89 = arith.cmpi sge, %88, %c0_i32_40 : i32
    %c64_i32_41 = arith.constant 64 : i32
    %90 = arith.cmpi slt, %88, %c64_i32_41 : i32
    %91 = arith.andi %89, %90 : i1
    %c0_i32_42 = arith.constant 0 : i32
    %92 = arith.select %91, %88, %c0_i32_42 : i32
    %93 = arith.index_cast %92 : i32 to index
    %c0_43 = arith.constant 0 : index
    %94 = vector.load %arg2[%93, %c0_43] : memref<64x128xf32, #tpu.memory_space<vmem>>, vector<1x128xf32>
    %95 = arith.index_cast %c7_i32 : i32 to index
    %c0_44 = arith.constant 0 : index
    %96 = vector.load %arg3[%95, %c0_44] : memref<8x128xf32, #tpu.memory_space<vmem>>, vector<1x128xf32>
    tpu.vector_store %arg3[%95, %c0_44], %94 {strides = array<i32>} : memref<8x128xf32, #tpu.memory_space<vmem>>, vector<1x128xf32>,
    %c8_i32_45 = arith.constant 8 : i32
    return
  }
  func.func @transform_0(%arg0: i32, %arg1: memref<16xi32, #tpu.memory_space<smem>>) -> (i32, i32) {
    %c0_i32 = arith.constant 0 : i32
    %c0_i32_0 = arith.constant 0 : i32
    %c0_i32_1 = arith.constant 0 : i32
    return %c0_i32, %c0_i32_0 : i32, i32
  }
  func.func @transform_1(%arg0: i32, %arg1: memref<16xi32, #tpu.memory_space<smem>>) -> (i32, i32) {
    %c0_i32 = arith.constant 0 : i32
    %c0_i32_0 = arith.constant 0 : i32
    return %arg0, %c0_i32 : i32, i32
  }
}

</mosaic_0001>

<llo_original>
// kernel: tpu_custom_call.1
$region0: #{tpu_custom_call.1}
  #allocation0 [shape = 'u32[]', space=smem, size = 0x4, offset = 0x4, fixed_abs, tag = 'smem constant byte address 0x4 - core index']
  #allocation1 [shape = 'u32[72,128]{1,0:T(1,128)}', space=vmem, size = 0x9000, scoped, tag = 'internal scratch']
  #allocation2 [shape = 's32[1]{0}', space=sflag, size = 0x4, scoped, tag = 'scoped memory for tpu_custom_call.1']
  #allocation3 [shape = 'u8[512]{0}', space=smem, size = 0x200, scoped, tag = 'prefetched SMEM operand 0']
  %s0 = inlined_call_operand.hbm [shape: s32[16], index: 0, kind: input, shape index: {}]
  %s1 = inlined_call_operand.hbm [shape: f32[64,128], index: 1, kind: input, shape index: {}]
  %s2 = inlined_call_operand.hbm [shape: f32[16,128], index: 2, kind: output, shape index: {}]
  %s3 = sld [smem:[#allocation0]]
  $region41: #{tpu_custom_call.1} parent=0
    _
  %s5 = ssub.s32 1, %s3
  %s6 = scalar_select 0, %s5, %s3
  %s8 = sshll.u32 %s0, 4
  %s9 = int_to_ptr.hbm [resolvable:$true] %s8
  %11 = dma.hbm_to_smem %s9, 16, [#allocation3], [#allocation2]
  %13 = dma.done [#allocation2], 16
  %14 = sfence
  $region1: #{tpu_custom_call.1} parent=0
    #allocation4 [shape = 'u8[32768]{0}', space=vmem, size = 0x8000, scoped, tag = 'input window, operand 1, single buffered']
    #allocation5 [shape = 's32[2]{0}', space=sflag, size = 0x8, scoped, tag = 'scoped memory for tpu_custom_call.1']
    #allocation6 [shape = 's32[2]{0}', space=sflag, size = 0x8, scoped, tag = 'scoped memory for tpu_custom_call.1']
    #allocation7 [shape = 'u8[8192]{0}', space=vmem, size = 0x2000, scoped, tag = 'output window, operand 0']
    %15 = vsyncpa [#allocation5], 0
    %16 = vsyncpa [#allocation6], 0
    %s17 = scalar_lea.sflag [#allocation6], 1
    %18 = vsyncpa %s17, 0
    loop: start=0, step=1, limit=4
    $region2: #{tpu_custom_call.1} parent=1 // loop_pre_header
      _
    $region3: #{tpu_custom_call.1} parent=1 // loop_header
      %s20 = sphi 0, %s24
      %p21 = scmp.ge.s32.totalorder %s20, 4
      %s28 = sphi 0, %s28
      %s30 = sphi 0, %s28
      %s31 = sphi 0, %s30
      %s45 = sphi 0, %s31
      %s51 = sphi 0, %s53
      %s54 = sphi 0, %s51
      %s55 = sphi 0, %s54
      %s71 = sphi 0, %s55
    $region4: #{tpu_custom_call.1} parent=1 // loop_header_branch
      %23 = sbr.rel (%p21) target = $region8
    $region5: #{tpu_custom_call.1} parent=1 // loop_body
      %s25 = ssub.s32 %s20, 1
      %s26 = ssub.s32 %s20, 2
      %s27 = sadd.s32 %s20, 1
      %s29 = sadd.s32 %s28, 1
      %p32 = scmp.eq.s32.totalorder %s20, 1
      %p33 = scmp.ne.s32.totalorder %s28, %s30
      %p34 = scmp.eq.s32.totalorder %s20, 0
      %p35 = por %p33, %p34
      %p36 = scmp.ne.s32.totalorder %s28, %s30
      %p37 = scmp.eq.s32.totalorder %s25, 1
      %p38 = por %p36, %p37
      %p39 = scmp.ne.s32.totalorder %s30, %s31
      %p40 = scmp.eq.s32.totalorder %s25, 0
      %p41 = por %p39, %p40
      %p42 = scmp.ne.s32.totalorder %s30, %s31
      %p43 = scmp.eq.s32.totalorder %s26, 1
      %p44 = por %p42, %p43
      %p46 = scmp.ne.s32.totalorder %s31, %s45
      %p47 = scmp.eq.s32.totalorder %s26, 0
      %p48 = por %p46, %p47
      %s49 = ssub.s32 %s20, %s27
      %p50 = scmp.eq.s32.totalorder %s49, 0
      %s52 = sadd.s32 %s51, 1
      %s53 = scalar_select %p50, %s51, %s52
      %p56 = pneg %p50
      %p57 = scmp.eq.s32.totalorder %s20, 1
      %p58 = por %p56, %p57
      %p59 = scmp.ne.s32.totalorder %s51, %s54
      %p60 = scmp.eq.s32.totalorder %s20, 0
      %p61 = por %p59, %p60
      %p62 = scmp.ne.s32.totalorder %s51, %s54
      %p63 = scmp.eq.s32.totalorder %s25, 1
      %p64 = por %p62, %p63
      %p65 = scmp.ne.s32.totalorder %s54, %s55
      %p66 = scmp.eq.s32.totalorder %s25, 0
      %p67 = por %p65, %p66
      %p68 = scmp.ne.s32.totalorder %s54, %s55
      %p69 = scmp.eq.s32.totalorder %s26, 1
      %p70 = por %p68, %p69
      %p72 = scmp.ne.s32.totalorder %s55, %s71
      %p73 = scmp.eq.s32.totalorder %s26, 0
      %p74 = por %p72, %p73
      %p75 = scmp.le.s32.totalorder 1, %s20
      %p76 = scmp.lt.s32.totalorder %s20, 3
      %p77 = pnand %p75, %p76
      %p78 = pneg %p77
      // Predicated region
      $region9: #{tpu_custom_call.1} parent=5 // pred_check
        _
      $region10: #{tpu_custom_call.1} parent=5 // pred_check_branch
        %80 = sbr.rel (%p77) target = $region12
      $region11: #{tpu_custom_call.1} parent=5 // pred_region
        %s81 = ssub.s32 %s20, 1
        // Predicated region
        $region13: #{tpu_custom_call.1} parent=11 // pred_check
          %p82 = pneg %p41
        $region14: #{tpu_custom_call.1} parent=11 // pred_check_branch
          %84 = sbr.rel (%p82) target = $region16
        $region15: #{tpu_custom_call.1} parent=11 // pred_region
          %86 = vsyncadd [#allocation5], 0
          %s87 = sshll.u32 %s1, 4
          %s88 = int_to_ptr.hbm [resolvable:$true] %s87
          %s89 = sshll.u32 [#allocation4], 4
          %s90 = int_to_ptr.vmem [resolvable:$true] %s89
          %95 = dma.hbm_to_vmem [thread:$0]  %s88, 1024, %s90, [#allocation5], 128, 128, 8
        $region16: #{tpu_custom_call.1} parent=11 // pred_fallthru
          _
      $region12: #{tpu_custom_call.1} parent=5 // pred_fallthru
        _
      %p96 = scmp.lt.s32.totalorder %s20, 2
      // Predicated region
      $region17: #{tpu_custom_call.1} parent=5 // pred_check
        %p97 = pneg %p96
      $region18: #{tpu_custom_call.1} parent=5 // pred_check_branch
        %99 = sbr.rel (%p97) target = $region20
      $region19: #{tpu_custom_call.1} parent=5 // pred_region
        _
      $region20: #{tpu_custom_call.1} parent=5 // pred_fallthru
        _
      %p100 = scmp.le.s32.totalorder 1, %s20
      %p101 = scmp.lt.s32.totalorder %s20, 3
      %p102 = pnand %p100, %p101
      %p103 = pneg %p102
      // Predicated region
      $region21: #{tpu_custom_call.1} parent=5 // pred_check
        _
      $region22: #{tpu_custom_call.1} parent=5 // pred_check_branch
        %105 = sbr.rel (%p102) target = $region24
      $region23: #{tpu_custom_call.1} parent=5 // pred_region
        %s106 = ssub.s32 %s20, 1
        // Predicated region
        $region25: #{tpu_custom_call.1} parent=23 // pred_check
          %p107 = pneg %p41
        $region26: #{tpu_custom_call.1} parent=23 // pred_check_branch
          %109 = sbr.rel (%p107) target = $region28
        $region27: #{tpu_custom_call.1} parent=23 // pred_region
          %111 = dma.done [#allocation5], 1024
        $region28: #{tpu_custom_call.1} parent=23 // pred_fallthru
          _
        %p112 = pneg %p41
        %p113 = pneg %p38
        %p114 = pneg %p67
        %p115 = pneg %p64
        %s116 = sand.u32 %s54, 1
        %s117 = scalar_lea.sflag [#allocation6], %s116
        %s118 = sand.u32 %s54, 1
        %s119 = smul.addr %s118, 8
        %s120 = scalar_lea.vmem [#allocation7], %s119
        %s121 = smul.u32 %s25, 8
        %p122 = scmp.lt.s32.totalorder %s121, 15
        %s123 = scalar_select %p122, %s121, 15
        %s124 = sld [smem:[#allocation3 + %s123]]
        %p125 = scmp.ge.s32.totalorder %s124, 0
        %p126 = scmp.lt.s32.totalorder %s124, 64
        %p127 = pnand %p125, %p126
        %p128 = pneg %p127
        %s129 = scalar_select %p128, %s124, 0
        %s130 = scalar_lea.vmem [#allocation4], %s129
        %v131 = vld [vmem:[%s130] sm:$0x1]
        %132 = vst [vmem:[%s120] sm:$0x1] %v131
        %s133 = sadd.s32 %s121, 1
        %p134 = scmp.lt.s32.totalorder %s133, 15
        %s135 = scalar_select %p134, %s133, 15
        %s136 = sld [smem:[#allocation3 + %s135]]
        %p137 = scmp.ge.s32.totalorder %s136, 0
        %p138 = scmp.lt.s32.totalorder %s136, 64
        %p139 = pnand %p137, %p138
        %p140 = pneg %p139
        %s141 = scalar_select %p140, %s136, 0
        %s142 = scalar_lea.vmem [#allocation4], %s141
        %v143 = vld [vmem:[%s142] sm:$0x1]
        %144 = vst [vmem:[%s120 + $0x1] sm:$0x1] %v143
        %s145 = sadd.s32 %s121, 2
        %p146 = scmp.lt.s32.totalorder %s145, 15
        %s147 = scalar_select %p146, %s145, 15
        %s148 = sld [smem:[#allocation3 + %s147]]
        %p149 = scmp.ge.s32.totalorder %s148, 0
        %p150 = scmp.lt.s32.totalorder %s148, 64
        %p151 = pnand %p149, %p150
        %p152 = pneg %p151
        %s153 = scalar_select %p152, %s148, 0
        %s154 = scalar_lea.vmem [#allocation4], %s153
        %v155 = vld [vmem:[%s154] sm:$0x1]
        %156 = vst [vmem:[%s120 + $0x2] sm:$0x1] %v155
        %s157 = sadd.s32 %s121, 3
        %p158 = scmp.lt.s32.totalorder %s157, 15
        %s159 = scalar_select %p158, %s157, 15
        %s160 = sld [smem:[#allocation3 + %s159]]
        %p161 = scmp.ge.s32.totalorder %s160, 0
        %p162 = scmp.lt.s32.totalorder %s160, 64
        %p163 = pnand %p161, %p162
        %p164 = pneg %p163
        %s165 = scalar_select %p164, %s160, 0
        %s166 = scalar_lea.vmem [#allocation4], %s165
        %v167 = vld [vmem:[%s166] sm:$0x1]
        %168 = vst [vmem:[%s120 + $0x3] sm:$0x1] %v167
        %s169 = sadd.s32 %s121, 4
        %p170 = scmp.lt.s32.totalorder %s169, 15
        %s171 = scalar_select %p170, %s169, 15
        %s172 = sld [smem:[#allocation3 + %s171]]
        %p173 = scmp.ge.s32.totalorder %s172, 0
        %p174 = scmp.lt.s32.totalorder %s172, 64
        %p175 = pnand %p173, %p174
        %p176 = pneg %p175
        %s177 = scalar_select %p176, %s172, 0
        %s178 = scalar_lea.vmem [#allocation4], %s177
        %v179 = vld [vmem:[%s178] sm:$0x1]
        %180 = vst [vmem:[%s120 + $0x4] sm:$0x1] %v179
        %s181 = sadd.s32 %s121, 5
        %p182 = scmp.lt.s32.totalorder %s181, 15
        %s183 = scalar_select %p182, %s181, 15
        %s184 = sld [smem:[#allocation3 + %s183]]
        %p185 = scmp.ge.s32.totalorder %s184, 0
        %p186 = scmp.lt.s32.totalorder %s184, 64
        %p187 = pnand %p185, %p186
        %p188 = pneg %p187
        %s189 = scalar_select %p188, %s184, 0
        %s190 = scalar_lea.vmem [#allocation4], %s189
        %v191 = vld [vmem:[%s190] sm:$0x1]
        %192 = vst [vmem:[%s120 + $0x5] sm:$0x1] %v191
        %s193 = sadd.s32 %s121, 6
        %p194 = scmp.lt.s32.totalorder %s193, 15
        %s195 = scalar_select %p194, %s193, 15
        %s196 = sld [smem:[#allocation3 + %s195]]
        %p197 = scmp.ge.s32.totalorder %s196, 0
        %p198 = scmp.lt.s32.totalorder %s196, 64
        %p199 = pnand %p197, %p198
        %p200 = pneg %p199
        %s201 = scalar_select %p200, %s196, 0
        %s202 = scalar_lea.vmem [#allocation4], %s201
        %v203 = vld [vmem:[%s202] sm:$0x1]
        %204 = vst [vmem:[%s120 + $0x6] sm:$0x1] %v203
        %s205 = sadd.s32 %s121, 7
        %p206 = scmp.lt.s32.totalorder %s205, 15
        %s207 = scalar_select %p206, %s205, 15
        %s208 = sld [smem:[#allocation3 + %s207]]
        %p209 = scmp.ge.s32.totalorder %s208, 0
        %p210 = scmp.lt.s32.totalorder %s208, 64
        %p211 = pnand %p209, %p210
        %p212 = pneg %p211
        %s213 = scalar_select %p212, %s208, 0
        %s214 = scalar_lea.vmem [#allocation4], %s213
        %v215 = vld [vmem:[%s214] sm:$0x1]
        %216 = vst [vmem:[%s120 + $0x7] sm:$0x1] %v215
        %s217 = sand.u32 %s54, 1
        %s218 = scalar_lea.sflag [#allocation6], %s217
        %s219 = sand.u32 %s54, 1
        %s220 = smul.addr %s219, 8
        %s221 = scalar_lea.vmem [#allocation7], %s220
        // Predicated region
        $region29: #{tpu_custom_call.1} parent=23 // pred_check
          %p222 = pneg %p64
        $region30: #{tpu_custom_call.1} parent=23 // pred_check_branch
          %224 = sbr.rel (%p222) target = $region32
        $region31: #{tpu_custom_call.1} parent=23 // pred_region
          %226 = vsyncadd %s218, 0
          %s227 = smul.addr %s25, 8
          %s228 = scalar_lea.hbm %s2, %s227
          %s230 = sshll.u32 %s221, 4
          %s231 = int_to_ptr.vmem [resolvable:$true] %s230
          %s232 = sshll.u32 %s228, 4
          %s233 = int_to_ptr.hbm [resolvable:$true] %s232
          %235 = dma.vmem_to_hbm [thread:$0]  %s231, 128, %s233, %s218
        $region32: #{tpu_custom_call.1} parent=23 // pred_fallthru
          _
      $region24: #{tpu_custom_call.1} parent=5 // pred_fallthru
        _
      %p236 = scmp.le.s32.totalorder 2, %s20
      // Predicated region
      $region33: #{tpu_custom_call.1} parent=5 // pred_check
        %p237 = pneg %p236
      $region34: #{tpu_custom_call.1} parent=5 // pred_check_branch
        %239 = sbr.rel (%p237) target = $region36
      $region35: #{tpu_custom_call.1} parent=5 // pred_region
        %s240 = ssub.s32 %s20, 2
        // Predicated region
        $region37: #{tpu_custom_call.1} parent=35 // pred_check
          %p241 = pneg %p70
        $region38: #{tpu_custom_call.1} parent=35 // pred_check_branch
          %243 = sbr.rel (%p241) target = $region40
        $region39: #{tpu_custom_call.1} parent=35 // pred_region
          %s244 = sand.u32 %s55, 1
          %s245 = scalar_lea.sflag [#allocation6], %s244
          %s246 = sand.u32 %s55, 1
          %s247 = smul.addr %s246, 8
          %s248 = scalar_lea.vmem [#allocation7], %s247
          %250 = dma.done %s245, 128
        $region40: #{tpu_custom_call.1} parent=35 // pred_fallthru
          _
      $region36: #{tpu_custom_call.1} parent=5 // pred_fallthru
        _
    $region6: #{tpu_custom_call.1} parent=1 // loop_footer
      %s24 = sadd.s32 1, %s20
    $region7: #{tpu_custom_call.1} parent=1 // loop_footer_branch
      %19 = sbr.rel target = $region3
    $region8: #{tpu_custom_call.1} parent=1 // loop_exit
      _
    %251 = vsyncpa [#allocation5], 1
    %s252 = scalar_lea.sflag [#allocation5], 1
    %253 = vsyncpa %s252, 1
    %254 = vsyncpa [#allocation6], 1
    %s255 = scalar_lea.sflag [#allocation6], 1
    %256 = vsyncpa %s255, 1

</llo_original>
